<compile_context>
chip_gen: v5e
topology: v5e:2x2
jax: 0.10.0
libtpu: 0.0.40
codegen_flags: <defaults>
</compile_context>

<pallas_src>
import jax
import jax.numpy as jnp
from jax.experimental import pallas as pl
from jax.experimental.pallas import tpu as pltpu


EPS = 1e-5

# Conservative per-call VMEM budget for the double-buffered in+out blocks:
# 2 buffers x (input + output) x row_tile x D x itemsize <= ~24 MiB.
# This fits v7x (64 MiB physical / 32 MiB scoped default) with headroom and is
# tiny relative to v5e/v6e's 128 MiB.
_BLOCK_VMEM_BUDGET = 24 * 1024 * 1024
# Raise the scoped VMEM limit explicitly (v5e's default is only 16 MiB) while
# staying under v7x's 64 MiB physical VMEM.
_VMEM_LIMIT_BYTES = 48 * 1024 * 1024


def _round_up(n, m):
    return ((n + m - 1) // m) * m


def _pick_row_tile(n_rows, d, itemsize):
    """Largest sublane-friendly row tile that fits the VMEM budget."""
    per_row_bytes = 2 * 2 * d * itemsize          # 2 bufs x (in + out) per row
    tile = _BLOCK_VMEM_BUDGET // max(per_row_bytes, 1)
    tile = max(16, min(1024, tile))
    tile = (tile // 16) * 16                      # multiple of 16: ok for f32 & bf16 packing
    # Never tile past the (padded) number of rows.
    tile = min(tile, _round_up(n_rows, 16))
    # Keep >= ~4 grid steps when possible so both TensorCores on v7x get work.
    while tile > 64 and pl.cdiv(n_rows, tile) < 4:
        tile = max(64, ((tile // 2) // 16) * 16)
    return tile


def _layernorm_kernel(x_ref, w_ref, o_ref):
    # x_ref: (row_tile, D) tile of rows in input dtype; w_ref: (1, D) f32
    # effective weight (= 1 + weight for residual_weight=True).
    x = x_ref[...].astype(jnp.float32)
    d = x.shape[-1]
    inv_d = 1.0 / d
    # Single pass: row sum and row sum-of-squares (independent XLU reductions).
    s1 = jnp.sum(x, axis=-1, keepdims=True)
    s2 = jnp.sum(x * x, axis=-1, keepdims=True)
    mean = s1 * inv_d
    var = jnp.maximum(s2 * inv_d - mean * mean, 0.0)   # biased variance (torch)
    inv = jax.lax.rsqrt(var + EPS)                     # EUP rsqrt
    y = (x - mean) * inv * w_ref[...]
    o_ref[...] = y.astype(o_ref.dtype)
    # TODO(synk): bias=False in the module's default config, so no bias add here.


def layer_norm_pallas(x, weight, *, residual_weight=True, row_tile=None):
    """x: (..., D). weight: (D,) raw parameter (effective weight = 1 + weight
    when residual_weight=True, matching the module's weight_proxy)."""
    orig_shape = x.shape
    D = orig_shape[-1]
    N = 1
    for s in orig_shape[:-1]:
        N *= s
    x2 = x.reshape(N, D)

    w_eff = (1.0 + weight) if residual_weight else weight
    w2 = w_eff.reshape(1, D).astype(jnp.float32)

    itemsize = jnp.dtype(x.dtype).itemsize
    if row_tile is None:
        row_tile = _pick_row_tile(N, D, itemsize)

    # cdiv + zero padding: no divisibility requirement on B*S.
    N_pad = pl.cdiv(N, row_tile) * row_tile
    if N_pad != N:
        x2 = jnp.pad(x2, ((0, N_pad - N), (0, 0)))

    grid = (N_pad // row_tile,)

    # TODO(synk): if production D < 128, pack several rows per 128-lane slab
    # (segmented reduction) to avoid masked partial stores; typical vision
    # hidden sizes (D >= 512, multiple of 128) need no change.
    out = pl.pallas_call(
        _layernorm_kernel,
        out_shape=jax.ShapeDtypeStruct((N_pad, D), x.dtype),
        grid_spec=pl.GridSpec(
            grid=grid,
            in_specs=[
                pl.BlockSpec((row_tile, D), lambda i: (i, 0)),
                pl.BlockSpec((1, D), lambda i: (0, 0)),  # weight stays VMEM-resident
            ],
            out_specs=pl.BlockSpec((row_tile, D), lambda i: (i, 0)),
        ),
        compiler_params=pltpu.CompilerParams(
            dimension_semantics=("parallel",),
            vmem_limit_bytes=_VMEM_LIMIT_BYTES,
        ),
    )(x2, w2)

    if N_pad != N:
        out = out[:N]
    return out.reshape(orig_shape)


def layer_norm_ref(x, weight, *, residual_weight=True):
    w_eff = (1.0 + weight) if residual_weight else weight
    xf = x.astype(jnp.float32)
    mean = jnp.mean(xf, axis=-1, keepdims=True)
    var = jnp.mean((xf - mean) ** 2, axis=-1, keepdims=True)
    y = (xf - mean) / jnp.sqrt(var + EPS) * w_eff.astype(jnp.float32)
    return y


if __name__ == "__main__":
    key = jax.random.PRNGKey(0)

    # Case 1: module-consistent small shape (batch=2, seq=8, hidden=32), f32.
    B, S, D = 2, 8, 32
    kx, kw, kx2, kw2 = jax.random.split(key, 4)
    x = jax.random.normal(kx, (B, S, D), dtype=jnp.float32)
    # reset_parameters(): residual_weight=True -> weight initialized to zeros
    # (effective scale = 1 + 0 = 1); bias disabled by default.
    weight = jnp.zeros((D,), dtype=jnp.float32)

    y = layer_norm_pallas(x, weight, residual_weight=True)
    y = jax.block_until_ready(y)
    y_ref = layer_norm_ref(x, weight, residual_weight=True).astype(x.dtype)
    assert y.shape == x.shape and y.dtype == x.dtype
    assert jnp.allclose(y, y_ref, atol=1e-5, rtol=1e-5), "f32 mismatch vs reference"

    # Case 2: bf16 input, non-multiple row count + non-trivial weight to
    # exercise the padding / tail path and bf16 I/O.
    B2, S2, D2 = 3, 37, 192
    x_bf = jax.random.normal(kx2, (B2, S2, D2), dtype=jnp.float32).astype(jnp.bfloat16)
    w2p = 0.1 * jax.random.normal(kw2, (D2,), dtype=jnp.float32)

    y_bf = layer_norm_pallas(x_bf, w2p, residual_weight=True)
    y_bf = jax.block_until_ready(y_bf)
    y_bf_ref = layer_norm_ref(x_bf, w2p, residual_weight=True)
    assert y_bf.shape == x_bf.shape and y_bf.dtype == x_bf.dtype
    assert jnp.allclose(y_bf.astype(jnp.float32), y_bf_ref, atol=3e-2, rtol=3e-2), \
        "bf16 mismatch vs reference"

    print("KERNEL_OK")
</pallas_src>

<mosaic_0001>
module attributes {stable_mosaic.version = 11 : i64} {
  func.func @_layernorm_kernel(%arg0: i32, %arg1: memref<16x32xf32, #tpu.memory_space<vmem>>, %arg2: memref<1x32xf32, #tpu.memory_space<vmem>>, %arg3: memref<16x32xf32, #tpu.memory_space<vmem>>) attributes {dimension_semantics = [#tpu.dimension_semantics<parallel>], iteration_bounds = array<i64: 1>, scalar_prefetch = 0 : i64, scratch_operands = 0 : i64, tpu.core_type = #tpu.core_type<tc>, window_params = [{transform_indices = @transform_0, window_bounds = array<i64: 16, 32>}, {pipeline_mode = #tpu.pipeline_mode<synchronous>, transform_indices = @transform_1, window_bounds = array<i64: 1, 32>}, {transform_indices = @transform_2, window_bounds = array<i64: 16, 32>}]} {
    %c0 = arith.constant 0 : index
    %c0_0 = arith.constant 0 : index
    %0 = vector.load %arg1[%c0, %c0_0] : memref<16x32xf32, #tpu.memory_space<vmem>>, vector<16x32xf32>
    %cst = arith.constant dense<0.000000e+00> : vector<16xf32>
    %1 = vector.multi_reduction <add>, %0, %cst [1] : vector<16x32xf32> to vector<16xf32>
    %2 = vector.shape_cast %1 : vector<16xf32> to vector<16x1xf32>
    %3 = arith.mulf %0, %0 : vector<16x32xf32>
    %cst_1 = arith.constant dense<0.000000e+00> : vector<16xf32>
    %4 = vector.multi_reduction <add>, %3, %cst_1 [1] : vector<16x32xf32> to vector<16xf32>
    %5 = vector.shape_cast %4 : vector<16xf32> to vector<16x1xf32>
    %cst_2 = arith.constant 3.125000e-02 : f32
    %6 = vector.broadcast %cst_2 : f32 to vector<16x1xf32>
    %7 = arith.mulf %2, %6 : vector<16x1xf32>
    %cst_3 = arith.constant 3.125000e-02 : f32
    %8 = vector.broadcast %cst_3 : f32 to vector<16x1xf32>
    %9 = arith.mulf %5, %8 : vector<16x1xf32>
    %10 = arith.mulf %7, %7 : vector<16x1xf32>
    %11 = arith.subf %9, %10 : vector<16x1xf32>
    %cst_4 = arith.constant 0.000000e+00 : f32
    %12 = vector.broadcast %cst_4 : f32 to vector<16x1xf32>
    %13 = arith.maximumf %11, %12 : vector<16x1xf32>
    %cst_5 = arith.constant 9.99999974E-6 : f32
    %14 = vector.broadcast %cst_5 : f32 to vector<16x1xf32>
    %15 = arith.addf %13, %14 : vector<16x1xf32>
    %16 = math.rsqrt %15 : vector<16x1xf32>
    %17 = vector.broadcast %7 : vector<16x1xf32> to vector<16x32xf32>
    %18 = arith.subf %0, %17 : vector<16x32xf32>
    %19 = vector.broadcast %16 : vector<16x1xf32> to vector<16x32xf32>
    %20 = arith.mulf %18, %19 : vector<16x32xf32>
    %c0_6 = arith.constant 0 : index
    %c0_7 = arith.constant 0 : index
    %21 = vector.load %arg2[%c0_6, %c0_7] : memref<1x32xf32, #tpu.memory_space<vmem>>, vector<1x32xf32>
    %22 = vector.broadcast %21 : vector<1x32xf32> to vector<16x32xf32>
    %23 = arith.mulf %20, %22 : vector<16x32xf32>
    %c0_8 = arith.constant 0 : index
    %c0_9 = arith.constant 0 : index
    %24 = vector.load %arg3[%c0_8, %c0_9] : memref<16x32xf32, #tpu.memory_space<vmem>>, vector<16x32xf32>
    tpu.vector_store %arg3[%c0_8, %c0_9], %23 {strides = array<i32>} : memref<16x32xf32, #tpu.memory_space<vmem>>, vector<16x32xf32>,
    return
  }
  func.func @transform_0(%arg0: i32) -> (i32, i32) {
    %c0_i32 = arith.constant 0 : i32
    %c0_i32_0 = arith.constant 0 : i32
    return %arg0, %c0_i32 : i32, i32
  }
  func.func @transform_1(%arg0: i32) -> (i32, i32) {
    %c0_i32 = arith.constant 0 : i32
    %c0_i32_0 = arith.constant 0 : i32
    %c0_i32_1 = arith.constant 0 : i32
    return %c0_i32, %c0_i32_0 : i32, i32
  }
  func.func @transform_2(%arg0: i32) -> (i32, i32) {
    %c0_i32 = arith.constant 0 : i32
    %c0_i32_0 = arith.constant 0 : i32
    return %arg0, %c0_i32 : i32, i32
  }
}

</mosaic_0001>

<llo_original>
// kernel: tpu_custom_call.1
$region0: #{tpu_custom_call.1}
  #allocation0 [shape = 'u32[]', space=smem, size = 0x4, offset = 0x4, fixed_abs, tag = 'smem constant byte address 0x4 - core index']
  #allocation1 [shape = 'u32[72,128]{1,0:T(1,128)}', space=vmem, size = 0x9000, scoped, tag = 'internal scratch']
  %s0 = inlined_call_operand.hbm [shape: f32[16,32], index: 0, kind: input, shape index: {}]
  %s1 = inlined_call_operand.hbm [shape: f32[1,32], index: 1, kind: input, shape index: {}]
  %s2 = inlined_call_operand.hbm [shape: f32[16,32], index: 2, kind: output, shape index: {}]
  %s3 = sld [smem:[#allocation0]]
  $region26: #{tpu_custom_call.1} parent=0
    _
  %s5 = ssub.s32 1, %s3
  %s6 = scalar_select 0, %s5, %s3
  $region1: #{tpu_custom_call.1} parent=0
    #allocation2 [shape = 'u8[8192]{0}', space=vmem, size = 0x2000, scoped, tag = 'input window, operand 0, single buffered']
    #allocation3 [shape = 's32[1]{0}', space=sflag, size = 0x4, scoped, tag = 'scoped memory for tpu_custom_call.1']
    #allocation4 [shape = 's32[1]{0}', space=sflag, size = 0x4, scoped, tag = 'scoped memory for tpu_custom_call.1']
    #allocation5 [shape = 'u8[512]{0}', space=vmem, size = 0x400, scoped, tag = 'input window, operand 1, single buffered']
    #allocation6 [shape = 's32[1]{0}', space=sflag, size = 0x4, scoped, tag = 'scoped memory for tpu_custom_call.1']
    #allocation7 [shape = 'u8[8192]{0}', space=vmem, size = 0x2000, scoped, tag = 'output window, operand 0, single buffered']
    %7 = vsyncpa [#allocation3], 0
    %8 = vsyncpa [#allocation6], 0
    %9 = vsyncpa [#allocation4], 0
    // Predicated region
    $region2: #{tpu_custom_call.1} parent=1 // pred_check
      _
    $region3: #{tpu_custom_call.1} parent=1 // pred_check_branch
      %11 = sbr.rel (0) target = $region5
    $region4: #{tpu_custom_call.1} parent=1 // pred_region
      %13 = vsyncadd [#allocation3], 0
      %s14 = sshll.u32 %s0, 4
      %s15 = int_to_ptr.hbm [resolvable:$true] %s14
      %s16 = sshll.u32 [#allocation2], 4
      %s17 = int_to_ptr.vmem [resolvable:$true] %s16
      %22 = dma.hbm_to_vmem [thread:$0]  %s15, 256, %s17, [#allocation3], 128, 128, 8
    $region5: #{tpu_custom_call.1} parent=1 // pred_fallthru
      _
    // Predicated region
    $region6: #{tpu_custom_call.1} parent=1 // pred_check
      _
    $region7: #{tpu_custom_call.1} parent=1 // pred_check_branch
      %24 = sbr.rel (0) target = $region9
    $region8: #{tpu_custom_call.1} parent=1 // pred_region
      %26 = vsyncadd [#allocation6], 0
      %s28 = sshll.u32 %s1, 4
      %s29 = int_to_ptr.hbm [resolvable:$true] %s28
      %s30 = sshll.u32 [#allocation5], 4
      %s31 = int_to_ptr.vmem [resolvable:$true] %s30
      %33 = dma.hbm_to_vmem [thread:$0]  %s29, 16, %s31, [#allocation6]
    $region9: #{tpu_custom_call.1} parent=1 // pred_fallthru
      _
    // Predicated region
    $region10: #{tpu_custom_call.1} parent=1 // pred_check
      _
    $region11: #{tpu_custom_call.1} parent=1 // pred_check_branch
      %35 = sbr.rel (0) target = $region13
    $region12: #{tpu_custom_call.1} parent=1 // pred_region
      %37 = dma.done [#allocation3], 256
    $region13: #{tpu_custom_call.1} parent=1 // pred_fallthru
      _
    // Predicated region
    $region14: #{tpu_custom_call.1} parent=1 // pred_check
      _
    $region15: #{tpu_custom_call.1} parent=1 // pred_check_branch
      %39 = sbr.rel (0) target = $region17
    $region16: #{tpu_custom_call.1} parent=1 // pred_region
      %41 = dma.done [#allocation6], 16
    $region17: #{tpu_custom_call.1} parent=1 // pred_fallthru
      _
    %v42 = vld [vmem:[#allocation2] sm:$0xff]
    %v43 = vld [vmem:[#allocation2 + $0x8] sm:$0xff]
    %vm44 = vcmask 261120
    %v45 = vsel %vm44, %v42, 0.0
    %46 = vadd.xlane.f32.xlu0 %v45
    %v47 = vpop.xlane.xlu0 %46
    %v48 = vsel %vm44, %v43, 0.0
    %49 = vadd.xlane.f32.xlu0 %v48
    %v50 = vpop.xlane.xlu0 %49
    %v51 = vmul.f32 %v42, %v42
    %v52 = vmul.f32 %v43, %v43
    %v53 = vsel %vm44, %v51, 0.0
    %54 = vadd.xlane.f32.xlu0 %v53
    %v55 = vpop.xlane.xlu0 %54
    %v56 = vsel %vm44, %v52, 0.0
    %57 = vadd.xlane.f32.xlu0 %v56
    %v58 = vpop.xlane.xlu0 %57
    %v59 = vmul.f32 %v47, 0.03125
    %v60 = vmul.f32 %v50, 0.03125
    %v61 = vmul.f32 %v55, 0.03125
    %v62 = vmul.f32 %v58, 0.03125
    %v63 = vmul.f32 %v59, %v59
    %v64 = vmul.f32 %v60, %v60
    %v65 = vsub.f32 %v61, %v63
    %v66 = vsub.f32 %v62, %v64
    %v67 = vmax.f32 %v65, 0.0
    %v68 = vmax.f32 %v66, 0.0
    %v69 = vadd.f32 %v67, 1e-05
    %v70 = vadd.f32 %v68, 1e-05
    %v71 = vrsqrt.pop %v69
    %v72 = vmul.f32 %v71, %v69
    %v73 = vmul.f32 %v72, %v71
    %v74 = vmul.f32 0.5, %v73
    %v75 = vsub.f32 1.5, %v74
    %v76 = vmul.f32 %v71, %v75
    %vm77 = vweird.f32 %v69
    %vm78 = vweird.f32 %v71
    %vm79 = vmor %vm77, %vm78
    %v80 = vsel %vm79, %v71, %v76
    %v81 = vrsqrt.pop %v70
    %v82 = vmul.f32 %v81, %v70
    %v83 = vmul.f32 %v82, %v81
    %v84 = vmul.f32 0.5, %v83
    %v85 = vsub.f32 1.5, %v84
    %v86 = vmul.f32 %v81, %v85
    %vm87 = vweird.f32 %v70
    %vm88 = vweird.f32 %v81
    %vm89 = vmor %vm87, %vm88
    %v90 = vsel %vm89, %v81, %v86
    %v91 = vsub.f32 %v42, %v59
    %v92 = vsub.f32 %v43, %v60
    %v93 = vmul.f32 %v91, %v80
    %v94 = vmul.f32 %v92, %v90
    %v95 = vld [vmem:[#allocation5] sm:$0x1]
    %v97 = vperm.slane %v95, 0
    %v99 = vmul.f32 %v93, %v97
    %v100 = vmul.f32 %v94, %v97
    %101 = vst.msk [vmem:[#allocation7] sm:$0xff] %vm44, %v99
    %102 = vst.msk [vmem:[#allocation7 + $0x8] sm:$0xff] %vm44, %v100
    // Predicated region
    $region18: #{tpu_custom_call.1} parent=1 // pred_check
      _
    $region19: #{tpu_custom_call.1} parent=1 // pred_check_branch
      %104 = sbr.rel (0) target = $region21
    $region20: #{tpu_custom_call.1} parent=1 // pred_region
      %106 = vsyncadd [#allocation4], 0
      %s107 = sshll.u32 [#allocation7], 4
      %s108 = int_to_ptr.vmem [resolvable:$true] %s107
      %s109 = sshll.u32 %s2, 4
      %s110 = int_to_ptr.hbm [resolvable:$true] %s109
      %115 = dma.vmem_to_hbm [thread:$0]  %s108, 256, %s110, [#allocation4], 128, 128, 8
    $region21: #{tpu_custom_call.1} parent=1 // pred_fallthru
      _
    // Predicated region
    $region22: #{tpu_custom_call.1} parent=1 // pred_check
      _
    $region23: #{tpu_custom_call.1} parent=1 // pred_check_branch
      %117 = sbr.rel (0) target = $region25
    $region24: #{tpu_custom_call.1} parent=1 // pred_region
      %119 = dma.done [#allocation4], 256
    $region25: #{tpu_custom_call.1} parent=1 // pred_fallthru
      _
    %120 = vsyncpa [#allocation3], 1
    %121 = vsyncpa [#allocation6], 1
    %122 = vsyncpa [#allocation4], 1

</llo_original>
